<compile_context>
chip_gen: v7x
topology: tpu7x:2x2x1
jax: 0.10.0
libtpu: 0.0.40
codegen_flags: <defaults>
</compile_context>

<pallas_src>
import functools

import jax
import jax.numpy as jnp
from jax.experimental import pallas as pl
from jax.experimental.pallas import tpu as pltpu


H1_PAD = 128   # hidden layer 1 padded 64 -> 128
H2 = 128       # hidden layer 2 (already 128)
OUT_RAW = 121  # true output features
OUT_PAD = 128  # output padded 121 -> 128 (lane-dense store)

MAX_TB = 4096  # v5e scoped-VMEM safety cap (out + x double-buffers stay small)


def _round_up(x, m):
    return ((x + m - 1) // m) * m


def _choose_tile_b(B, tile_b):
    """Batch tile: multiple of 8, capped for VMEM, >=2 grid steps when large."""
    B8 = _round_up(max(B, 1), 8)
    TB = max(8, _round_up(min(tile_b, B8), 8))
    # v7x: keep at least 2 grid steps so the 'parallel' batch axis shards
    # across both TensorCores, as long as each tile stays reasonably sized.
    if TB >= B8 and B8 >= 512:
        TB = _round_up((B8 + 1) // 2, 8)
    return min(TB, MAX_TB)


def prepare_params(params, *, use_bf16=False):
    """One-time lane-dense zero-padding of the Linear params.

    Weights optionally cast to bf16 (MXU-native); biases stay f32 because
    they are added to the f32 accumulator inside the kernel.
    """
    w1, b1, w2, b2, w3, b3 = params
    n_z = w1.shape[0]
    wdt = jnp.bfloat16 if use_bf16 else jnp.float32

    w1p = jnp.zeros((n_z, H1_PAD), wdt).at[:, :w1.shape[1]].set(w1.astype(wdt))
    b1p = jnp.zeros((1, H1_PAD), jnp.float32).at[:, :b1.shape[1]].set(
        b1.astype(jnp.float32))
    w2p = jnp.zeros((H1_PAD, H2), wdt).at[:w2.shape[0], :].set(w2.astype(wdt))
    b2p = b2.reshape(1, H2).astype(jnp.float32)
    w3p = jnp.zeros((H2, OUT_PAD), wdt).at[:, :OUT_RAW].set(w3.astype(wdt))
    b3p = jnp.zeros((1, OUT_PAD), jnp.float32).at[:, :OUT_RAW].set(
        b3.astype(jnp.float32))
    return (w1p, b1p, w2p, b2p, w3p, b3p)


def wae_decoder_kernel(x_ref, w1_ref, b1_ref, w2_ref, b2_ref, w3_ref, b3_ref,
                       o_ref):
    cdt = w1_ref.dtype  # compute dtype of the MXU operands (f32 or bf16)

    # Layer 1: Linear(n_z, 128_padded) + ReLU   (f32 accumulation)
    h1 = jnp.dot(x_ref[...].astype(cdt), w1_ref[...],
                 preferred_element_type=jnp.float32) + b1_ref[...]
    h1 = jnp.maximum(h1, 0.0)

    # Layer 2: Linear(128, 128) + ReLU
    h2 = jnp.dot(h1.astype(cdt), w2_ref[...],
                 preferred_element_type=jnp.float32) + b2_ref[...]
    h2 = jnp.maximum(h2, 0.0)

    # Layer 3: Linear(128, 128_padded) + Tanh (tanh on EUP, free under MXU slack)
    h3 = jnp.dot(h2.astype(cdt), w3_ref[...],
                 preferred_element_type=jnp.float32) + b3_ref[...]
    o_ref[...] = jnp.tanh(h3).astype(o_ref.dtype)


@functools.partial(jax.jit, static_argnames=("tile_b",))
def wae_decoder_forward(x, padded_params, *, tile_b=2048):
    """x: [B, n_z] float32, padded_params from prepare_params -> [B, 121] f32."""
    w1p, b1p, w2p, b2p, w3p, b3p = padded_params
    B, n_z = x.shape

    TB = _choose_tile_b(B, tile_b)
    B_pad = _round_up(B, TB)
    x_p = x if B_pad == B else jnp.pad(x, ((0, B_pad - B), (0, 0)))
    grid = (B_pad // TB,)

    # Advisory cost estimate for the surrounding XLA graph.
    flops = 2 * B_pad * (n_z * H1_PAD + H1_PAD * H2 + H2 * OUT_PAD)
    wbytes = (w1p.size + w2p.size + w3p.size) * w1p.dtype.itemsize
    bytes_accessed = (4 * (B_pad * n_z + B_pad * OUT_PAD
                           + H1_PAD + H2 + OUT_PAD) + wbytes)
    cost = pl.CostEstimate(flops=flops,
                           transcendentals=B_pad * OUT_PAD,
                           bytes_accessed=bytes_accessed)

    out_p = pl.pallas_call(
        wae_decoder_kernel,
        out_shape=jax.ShapeDtypeStruct((B_pad, OUT_PAD), jnp.float32),
        grid_spec=pltpu.PrefetchScalarGridSpec(
            num_scalar_prefetch=0,
            grid=grid,
            in_specs=[
                # Activations: tiled along batch (TB is a multiple of 8).
                pl.BlockSpec((TB, n_z), lambda i: (i, 0)),
                # Params: constant block index -> stay resident in VMEM.
                pl.BlockSpec((n_z, H1_PAD), lambda i: (0, 0)),
                pl.BlockSpec((1, H1_PAD), lambda i: (0, 0)),
                pl.BlockSpec((H1_PAD, H2), lambda i: (0, 0)),
                pl.BlockSpec((1, H2), lambda i: (0, 0)),
                pl.BlockSpec((H2, OUT_PAD), lambda i: (0, 0)),
                pl.BlockSpec((1, OUT_PAD), lambda i: (0, 0)),
            ],
            out_specs=pl.BlockSpec((TB, OUT_PAD), lambda i: (i, 0)),
        ),
        compiler_params=pltpu.CompilerParams(
            dimension_semantics=("parallel",),
            vmem_limit_bytes=64 * 1024 * 1024),
        cost_estimate=cost,
    )(x_p, w1p, b1p, w2p, b2p, w3p, b3p)

    # Drop batch padding and the 7 padded output lanes (exact module shape).
    return out_p[:B, :OUT_RAW]


def init_params(key, n_z):
    """Deterministic parameter init matching the nn.Linear shapes."""
    ks = jax.random.split(key, 6)

    def uniform_init(k, shape, fan_in):
        bound = 1.0 / jnp.sqrt(jnp.float32(fan_in))
        return jax.random.uniform(k, shape, jnp.float32, -bound, bound)

    w1 = uniform_init(ks[0], (n_z, 64), n_z)
    b1 = uniform_init(ks[1], (1, 64), n_z)
    w2 = uniform_init(ks[2], (64, 128), 64)
    b2 = uniform_init(ks[3], (1, 128), 64)
    w3 = uniform_init(ks[4], (128, 121), 128)
    b3 = uniform_init(ks[5], (1, 121), 128)
    return (w1, b1, w2, b2, w3, b3)


def reference_forward(x, params):
    w1, b1, w2, b2, w3, b3 = params
    h1 = jnp.maximum(x @ w1 + b1, 0.0)
    h2 = jnp.maximum(h1 @ w2 + b2, 0.0)
    return jnp.tanh(h2 @ w3 + b3)


if __name__ == "__main__":
    # args = {'n_channel': 1, 'dim_h': 32, 'n_z': 8}  (only n_z feeds the fc stack)
    n_z = 8
    batch = 2

    key = jax.random.PRNGKey(0)
    k_x, k_p, k_x2 = jax.random.split(key, 3)
    params = init_params(k_p, n_z)

    # --- Exact f32 path (reference-tight tolerances). ---
    params_f32 = prepare_params(params, use_bf16=False)

    x = jax.random.normal(k_x, (batch, n_z), dtype=jnp.float32)
    out = jax.block_until_ready(wae_decoder_forward(x, params_f32))
    ref = reference_forward(x, params)
    assert out.shape == (batch, 121), out.shape
    assert jnp.allclose(out, ref, atol=1e-5, rtol=1e-5), "mismatch vs reference"

    # Batch not a multiple of the tile -> exercises grid + padding + 8-rounding.
    x2 = jax.random.normal(k_x2, (1030, n_z), dtype=jnp.float32)
    out2 = jax.block_until_ready(wae_decoder_forward(x2, params_f32, tile_b=200))
    ref2 = reference_forward(x2, params)
    assert out2.shape == (1030, 121), out2.shape
    assert jnp.allclose(out2, ref2, atol=1e-5, rtol=1e-5), "mismatch (tiled f32)"

    # --- bf16 MXU-operand path (f32 accumulation, looser tolerance). ---
    params_bf16 = prepare_params(params, use_bf16=True)
    out3 = jax.block_until_ready(wae_decoder_forward(x2, params_bf16))
    assert out3.shape == (1030, 121), out3.shape
    assert jnp.allclose(out3, ref2, atol=3e-2, rtol=3e-2), "mismatch (bf16)"

    print("KERNEL_OK")
</pallas_src>

<mosaic_0001>
module attributes {stable_mosaic.version = 11 : i64} {
  func.func @wae_decoder_kernel(%arg0: i32, %arg1: memref<8x8xf32, #tpu.memory_space<vmem>>, %arg2: memref<8x128xf32, #tpu.memory_space<vmem>>, %arg3: memref<1x128xf32, #tpu.memory_space<vmem>>, %arg4: memref<128x128xf32, #tpu.memory_space<vmem>>, %arg5: memref<1x128xf32, #tpu.memory_space<vmem>>, %arg6: memref<128x128xf32, #tpu.memory_space<vmem>>, %arg7: memref<1x128xf32, #tpu.memory_space<vmem>>, %arg8: memref<8x128xf32, #tpu.memory_space<vmem>>) attributes {dimension_semantics = [#tpu.dimension_semantics<parallel>], iteration_bounds = array<i64: 1>, scalar_prefetch = 0 : i64, scratch_operands = 0 : i64, tpu.core_type = #tpu.core_type<tc>, window_params = [{transform_indices = @transform_0, window_bounds = array<i64: 8, 8>}, {pipeline_mode = #tpu.pipeline_mode<synchronous>, transform_indices = @transform_1, window_bounds = array<i64: 8, 128>}, {pipeline_mode = #tpu.pipeline_mode<synchronous>, transform_indices = @transform_2, window_bounds = array<i64: 1, 128>}, {pipeline_mode = #tpu.pipeline_mode<synchronous>, transform_indices = @transform_3, window_bounds = array<i64: 128, 128>}, {pipeline_mode = #tpu.pipeline_mode<synchronous>, transform_indices = @transform_4, window_bounds = array<i64: 1, 128>}, {pipeline_mode = #tpu.pipeline_mode<synchronous>, transform_indices = @transform_5, window_bounds = array<i64: 128, 128>}, {pipeline_mode = #tpu.pipeline_mode<synchronous>, transform_indices = @transform_6, window_bounds = array<i64: 1, 128>}, {transform_indices = @transform_7, window_bounds = array<i64: 8, 128>}]} {
    %c0 = arith.constant 0 : index
    %c0_0 = arith.constant 0 : index
    %0 = vector.load %arg1[%c0, %c0_0] : memref<8x8xf32, #tpu.memory_space<vmem>>, vector<8x8xf32>
    %c0_1 = arith.constant 0 : index
    %c0_2 = arith.constant 0 : index
    %1 = vector.load %arg2[%c0_1, %c0_2] : memref<8x128xf32, #tpu.memory_space<vmem>>, vector<8x128xf32>
    %cst = arith.constant dense<0.000000e+00> : vector<8x128xf32>
    %2 = tpu.matmul %0, %1, %cst {dimension_numbers = #tpu.dot_dimension_numbers<[1], [0], [0], [1], [0, 0, 1, 1], [], []>} : vector<8x8xf32>, vector<8x128xf32>, vector<8x128xf32> -> vector<8x128xf32>
    %c0_3 = arith.constant 0 : index
    %c0_4 = arith.constant 0 : index
    %3 = vector.load %arg3[%c0_3, %c0_4] : memref<1x128xf32, #tpu.memory_space<vmem>>, vector<1x128xf32>
    %4 = vector.broadcast %3 : vector<1x128xf32> to vector<8x128xf32>
    %5 = arith.addf %2, %4 : vector<8x128xf32>
    %cst_5 = arith.constant 0.000000e+00 : f32
    %6 = vector.broadcast %cst_5 : f32 to vector<8x128xf32>
    %7 = arith.maximumf %5, %6 : vector<8x128xf32>
    %c0_6 = arith.constant 0 : index
    %c0_7 = arith.constant 0 : index
    %8 = vector.load %arg4[%c0_6, %c0_7] : memref<128x128xf32, #tpu.memory_space<vmem>>, vector<128x128xf32>
    %cst_8 = arith.constant dense<0.000000e+00> : vector<8x128xf32>
    %9 = tpu.matmul %7, %8, %cst_8 {dimension_numbers = #tpu.dot_dimension_numbers<[1], [0], [0], [1], [0, 0, 1, 1], [], []>} : vector<8x128xf32>, vector<128x128xf32>, vector<8x128xf32> -> vector<8x128xf32>
    %c0_9 = arith.constant 0 : index
    %c0_10 = arith.constant 0 : index
    %10 = vector.load %arg5[%c0_9, %c0_10] : memref<1x128xf32, #tpu.memory_space<vmem>>, vector<1x128xf32>
    %11 = vector.broadcast %10 : vector<1x128xf32> to vector<8x128xf32>
    %12 = arith.addf %9, %11 : vector<8x128xf32>
    %cst_11 = arith.constant 0.000000e+00 : f32
    %13 = vector.broadcast %cst_11 : f32 to vector<8x128xf32>
    %14 = arith.maximumf %12, %13 : vector<8x128xf32>
    %c0_12 = arith.constant 0 : index
    %c0_13 = arith.constant 0 : index
    %15 = vector.load %arg6[%c0_12, %c0_13] : memref<128x128xf32, #tpu.memory_space<vmem>>, vector<128x128xf32>
    %cst_14 = arith.constant dense<0.000000e+00> : vector<8x128xf32>
    %16 = tpu.matmul %14, %15, %cst_14 {dimension_numbers = #tpu.dot_dimension_numbers<[1], [0], [0], [1], [0, 0, 1, 1], [], []>} : vector<8x128xf32>, vector<128x128xf32>, vector<8x128xf32> -> vector<8x128xf32>
    %c0_15 = arith.constant 0 : index
    %c0_16 = arith.constant 0 : index
    %17 = vector.load %arg7[%c0_15, %c0_16] : memref<1x128xf32, #tpu.memory_space<vmem>>, vector<1x128xf32>
    %18 = vector.broadcast %17 : vector<1x128xf32> to vector<8x128xf32>
    %19 = arith.addf %16, %18 : vector<8x128xf32>
    %20 = math.tanh %19 : vector<8x128xf32>
    %c0_17 = arith.constant 0 : index
    %c0_18 = arith.constant 0 : index
    %21 = vector.load %arg8[%c0_17, %c0_18] : memref<8x128xf32, #tpu.memory_space<vmem>>, vector<8x128xf32>
    tpu.vector_store %arg8[%c0_17, %c0_18], %20 {strides = array<i32>} : memref<8x128xf32, #tpu.memory_space<vmem>>, vector<8x128xf32>,
    return
  }
  func.func @transform_0(%arg0: i32) -> (i32, i32) {
    %c0_i32 = arith.constant 0 : i32
    %c0_i32_0 = arith.constant 0 : i32
    return %arg0, %c0_i32 : i32, i32
  }
  func.func @transform_1(%arg0: i32) -> (i32, i32) {
    %c0_i32 = arith.constant 0 : i32
    %c0_i32_0 = arith.constant 0 : i32
    %c0_i32_1 = arith.constant 0 : i32
    return %c0_i32, %c0_i32_0 : i32, i32
  }
  func.func @transform_2(%arg0: i32) -> (i32, i32) {
    %c0_i32 = arith.constant 0 : i32
    %c0_i32_0 = arith.constant 0 : i32
    %c0_i32_1 = arith.constant 0 : i32
    return %c0_i32, %c0_i32_0 : i32, i32
  }
  func.func @transform_3(%arg0: i32) -> (i32, i32) {
    %c0_i32 = arith.constant 0 : i32
    %c0_i32_0 = arith.constant 0 : i32
    %c0_i32_1 = arith.constant 0 : i32
    return %c0_i32, %c0_i32_0 : i32, i32
  }
  func.func @transform_4(%arg0: i32) -> (i32, i32) {
    %c0_i32 = arith.constant 0 : i32
    %c0_i32_0 = arith.constant 0 : i32
    %c0_i32_1 = arith.constant 0 : i32
    return %c0_i32, %c0_i32_0 : i32, i32
  }
  func.func @transform_5(%arg0: i32) -> (i32, i32) {
    %c0_i32 = arith.constant 0 : i32
    %c0_i32_0 = arith.constant 0 : i32
    %c0_i32_1 = arith.constant 0 : i32
    return %c0_i32, %c0_i32_0 : i32, i32
  }
  func.func @transform_6(%arg0: i32) -> (i32, i32) {
    %c0_i32 = arith.constant 0 : i32
    %c0_i32_0 = arith.constant 0 : i32
    %c0_i32_1 = arith.constant 0 : i32
    return %c0_i32, %c0_i32_0 : i32, i32
  }
  func.func @transform_7(%arg0: i32) -> (i32, i32) {
    %c0_i32 = arith.constant 0 : i32
    %c0_i32_0 = arith.constant 0 : i32
    return %arg0, %c0_i32 : i32, i32
  }
}

</mosaic_0001>

<llo_original>
// kernel: wae_decoder_forward.1
$region0: #{wae_decoder_forward.1}
  #allocation0 [shape = 'u32[]', space=smem, size = 0x4, offset = 0x4, fixed_abs, tag = 'smem constant byte address 0x4 - core index']
  #allocation1 [shape = 'u32[144,128]{1,0:T(1,128)}', space=vmem, size = 0x12000, scoped, tag = 'internal scratch']
  %s0 = inlined_call_operand.hbm [shape: f32[8,8], index: 0, kind: input, shape index: {}]
  %s1 = inlined_call_operand.hbm [shape: f32[8,128], index: 1, kind: input, shape index: {}]
  %s2 = inlined_call_operand.hbm [shape: f32[1,128], index: 2, kind: input, shape index: {}]
  %s3 = inlined_call_operand.hbm [shape: f32[128,128], index: 3, kind: input, shape index: {}]
  %s4 = inlined_call_operand.hbm [shape: f32[1,128], index: 4, kind: input, shape index: {}]
  %s5 = inlined_call_operand.hbm [shape: f32[128,128], index: 5, kind: input, shape index: {}]
  %s6 = inlined_call_operand.hbm [shape: f32[1,128], index: 6, kind: input, shape index: {}]
  %s7 = inlined_call_operand.hbm [shape: f32[8,128], index: 7, kind: output, shape index: {}]
  %s8 = sld [smem:[#allocation0]]
  $region66: #{wae_decoder_forward.1} parent=0
    _
  %s10 = ssub.s32 1, %s8
  %s11 = scalar_select 0, %s10, %s8
  $region1: #{wae_decoder_forward.1} parent=0
    #allocation2 [shape = 'u8[4096]{0}', space=vmem, size = 0x1000, scoped, tag = 'input window, operand 0, single buffered']
    #allocation3 [shape = 's32[1]{0}', space=sflag, size = 0x4, scoped, tag = 'scoped memory for wae_decoder_forward.1']
    #allocation4 [shape = 's32[1]{0}', space=sflag, size = 0x4, scoped, tag = 'scoped memory for wae_decoder_forward.1']
    #allocation5 [shape = 'u8[4096]{0}', space=vmem, size = 0x1000, scoped, tag = 'input window, operand 1, single buffered']
    #allocation6 [shape = 's32[1]{0}', space=sflag, size = 0x4, scoped, tag = 'scoped memory for wae_decoder_forward.1']
    #allocation7 [shape = 'u8[512]{0}', space=vmem, size = 0x400, scoped, tag = 'input window, operand 2, single buffered']
    #allocation8 [shape = 'u8[65536]{0}', space=vmem, size = 0x10000, scoped, tag = 'input window, operand 3, single buffered']
    #allocation9 [shape = 's32[1]{0}', space=sflag, size = 0x4, scoped, tag = 'scoped memory for wae_decoder_forward.1']
    #allocation10 [shape = 'u8[512]{0}', space=vmem, size = 0x400, scoped, tag = 'input window, operand 4, single buffered']
    #allocation11 [shape = 'u8[65536]{0}', space=vmem, size = 0x10000, scoped, tag = 'input window, operand 5, single buffered']
    #allocation12 [shape = 's32[1]{0}', space=sflag, size = 0x4, scoped, tag = 'scoped memory for wae_decoder_forward.1']
    #allocation13 [shape = 'u8[512]{0}', space=vmem, size = 0x400, scoped, tag = 'input window, operand 6, single buffered']
    #allocation14 [shape = 'u8[4096]{0}', space=vmem, size = 0x1000, scoped, tag = 'output window, operand 0, single buffered']
    %12 = vsyncpa [#allocation3], 0
    %13 = vsyncpa [#allocation6], 0
    %14 = vsyncpa [#allocation9], 0
    %15 = vsyncpa [#allocation12], 0
    %16 = vsyncpa [#allocation4], 0
    // Predicated region
    $region2: #{wae_decoder_forward.1} parent=1 // pred_check
      _
    $region3: #{wae_decoder_forward.1} parent=1 // pred_check_branch
      %18 = sbr.rel (0) target = $region5
    $region4: #{wae_decoder_forward.1} parent=1 // pred_region
      %s20 = ssub.s32 128, 128
      %21 = vsyncadd [#allocation3], %s20
      %s23 = sshll.u32 [#allocation2], 4
      %s24 = int_to_ptr.vmem [resolvable:$true] %s23
      %26 = dma.hbm_to_vmem [thread:$0]  %s0, 128, %s24, [#allocation3]
    $region5: #{wae_decoder_forward.1} parent=1 // pred_fallthru
      _
    // Predicated region
    $region6: #{wae_decoder_forward.1} parent=1 // pred_check
      _
    $region7: #{wae_decoder_forward.1} parent=1 // pred_check_branch
      %28 = sbr.rel (0) target = $region9
    $region8: #{wae_decoder_forward.1} parent=1 // pred_region
      %s30 = ssub.s32 128, 128
      %31 = vsyncadd [#allocation6], %s30
      %s33 = sshll.u32 [#allocation5], 4
      %s34 = int_to_ptr.vmem [resolvable:$true] %s33
      %36 = dma.hbm_to_vmem [thread:$0]  %s1, 128, %s34, [#allocation6]
    $region9: #{wae_decoder_forward.1} parent=1 // pred_fallthru
      _
    // Predicated region
    $region10: #{wae_decoder_forward.1} parent=1 // pred_check
      _
    $region11: #{wae_decoder_forward.1} parent=1 // pred_check_branch
      %38 = sbr.rel (0) target = $region13
    $region12: #{wae_decoder_forward.1} parent=1 // pred_region
      %s40 = ssub.s32 16, 16
      %41 = vsyncadd [#allocation6], %s40
      %s43 = sshll.u32 [#allocation7], 4
      %s44 = int_to_ptr.vmem [resolvable:$true] %s43
      %46 = dma.hbm_to_vmem [thread:$0]  %s2, 16, %s44, [#allocation6]
    $region13: #{wae_decoder_forward.1} parent=1 // pred_fallthru
      _
    // Predicated region
    $region14: #{wae_decoder_forward.1} parent=1 // pred_check
      _
    $region15: #{wae_decoder_forward.1} parent=1 // pred_check_branch
      %48 = sbr.rel (0) target = $region17
    $region16: #{wae_decoder_forward.1} parent=1 // pred_region
      %s50 = ssub.s32 2048, 2048
      %51 = vsyncadd [#allocation9], %s50
      %s52 = sshll.u32 [#allocation8], 4
      %s53 = int_to_ptr.vmem [resolvable:$true] %s52
      %58 = dma.hbm_to_vmem [thread:$0]  %s3, 2048, %s53, [#allocation9], 128, 128, 8
    $region17: #{wae_decoder_forward.1} parent=1 // pred_fallthru
      _
    // Predicated region
    $region18: #{wae_decoder_forward.1} parent=1 // pred_check
      _
    $region19: #{wae_decoder_forward.1} parent=1 // pred_check_branch
      %60 = sbr.rel (0) target = $region21
    $region20: #{wae_decoder_forward.1} parent=1 // pred_region
      %s62 = ssub.s32 16, 16
      %63 = vsyncadd [#allocation9], %s62
      %s65 = sshll.u32 [#allocation10], 4
      %s66 = int_to_ptr.vmem [resolvable:$true] %s65
      %68 = dma.hbm_to_vmem [thread:$0]  %s4, 16, %s66, [#allocation9]
    $region21: #{wae_decoder_forward.1} parent=1 // pred_fallthru
      _
    // Predicated region
    $region22: #{wae_decoder_forward.1} parent=1 // pred_check
      _
    $region23: #{wae_decoder_forward.1} parent=1 // pred_check_branch
      %70 = sbr.rel (0) target = $region25
    $region24: #{wae_decoder_forward.1} parent=1 // pred_region
      %s72 = ssub.s32 2048, 2048
      %73 = vsyncadd [#allocation12], %s72
      %s74 = sshll.u32 [#allocation11], 4
      %s75 = int_to_ptr.vmem [resolvable:$true] %s74
      %80 = dma.hbm_to_vmem [thread:$0]  %s5, 2048, %s75, [#allocation12], 128, 128, 8
    $region25: #{wae_decoder_forward.1} parent=1 // pred_fallthru
      _
    // Predicated region
    $region26: #{wae_decoder_forward.1} parent=1 // pred_check
      _
    $region27: #{wae_decoder_forward.1} parent=1 // pred_check_branch
      %82 = sbr.rel (0) target = $region29
    $region28: #{wae_decoder_forward.1} parent=1 // pred_region
      %s84 = ssub.s32 16, 16
      %85 = vsyncadd [#allocation12], %s84
      %s87 = sshll.u32 [#allocation13], 4
      %s88 = int_to_ptr.vmem [resolvable:$true] %s87
      %90 = dma.hbm_to_vmem [thread:$0]  %s6, 16, %s88, [#allocation12]
    $region29: #{wae_decoder_forward.1} parent=1 // pred_fallthru
      _
    // Predicated region
    $region30: #{wae_decoder_forward.1} parent=1 // pred_check
      _
    $region31: #{wae_decoder_forward.1} parent=1 // pred_check_branch
      %92 = sbr.rel (0) target = $region33
    $region32: #{wae_decoder_forward.1} parent=1 // pred_region
      %93 = dma.done [#allocation3], 128
    $region33: #{wae_decoder_forward.1} parent=1 // pred_fallthru
      _
    // Predicated region
    $region34: #{wae_decoder_forward.1} parent=1 // pred_check
      _
    $region35: #{wae_decoder_forward.1} parent=1 // pred_check_branch
      %95 = sbr.rel (0) target = $region37
    $region36: #{wae_decoder_forward.1} parent=1 // pred_region
      %96 = dma.done [#allocation6], 128
    $region37: #{wae_decoder_forward.1} parent=1 // pred_fallthru
      _
    // Predicated region
    $region38: #{wae_decoder_forward.1} parent=1 // pred_check
      _
    $region39: #{wae_decoder_forward.1} parent=1 // pred_check_branch
      %98 = sbr.rel (0) target = $region41
    $region40: #{wae_decoder_forward.1} parent=1 // pred_region
      %99 = dma.done [#allocation6], 16
    $region41: #{wae_decoder_forward.1} parent=1 // pred_fallthru
      _
    // Predicated region
    $region42: #{wae_decoder_forward.1} parent=1 // pred_check
      _
    $region43: #{wae_decoder_forward.1} parent=1 // pred_check_branch
      %101 = sbr.rel (0) target = $region45
    $region44: #{wae_decoder_forward.1} parent=1 // pred_region
      %102 = dma.done [#allocation9], 2048
    $region45: #{wae_decoder_forward.1} parent=1 // pred_fallthru
      _
    // Predicated region
    $region46: #{wae_decoder_forward.1} parent=1 // pred_check
      _
    $region47: #{wae_decoder_forward.1} parent=1 // pred_check_branch
      %104 = sbr.rel (0) target = $region49
    $region48: #{wae_decoder_forward.1} parent=1 // pred_region
      %105 = dma.done [#allocation9], 16
    $region49: #{wae_decoder_forward.1} parent=1 // pred_fallthru
      _
    // Predicated region
    $region50: #{wae_decoder_forward.1} parent=1 // pred_check
      _
    $region51: #{wae_decoder_forward.1} parent=1 // pred_check_branch
      %107 = sbr.rel (0) target = $region53
    $region52: #{wae_decoder_forward.1} parent=1 // pred_region
      %108 = dma.done [#allocation12], 2048
    $region53: #{wae_decoder_forward.1} parent=1 // pred_fallthru
      _
    // Predicated region
    $region54: #{wae_decoder_forward.1} parent=1 // pred_check
      _
    $region55: #{wae_decoder_forward.1} parent=1 // pred_check_branch
      %110 = sbr.rel (0) target = $region57
    $region56: #{wae_decoder_forward.1} parent=1 // pred_region
      %111 = dma.done [#allocation12], 16
    $region57: #{wae_decoder_forward.1} parent=1 // pred_fallthru
      _
    %v112 = vld [vmem:[#allocation2] sm:$0xff]
    %v113 = vld [vmem:[#allocation5] sm:$0xff]
    %v114 = vld [vmem:[#allocation7] sm:$0x1]
    %v116 = vlaneseq
    %v117 = vshrl.u32 %v116, 7
    %v118 = vsub.s32 0, %v117
    %v119 = vrot.slane %v114, %v118
    %vm121 = vcmask 64512
    %v123 = vsel %vm121, %v112, 0
    %125 = vmatprep.subr.mxu0 0.0
    %126 = vmatpush1.msra.mxu0 %v113
    %127 = vmatprep.subr.mxu0 0.0
    %128 = vmatpush1.msra.mxu0 0.0
    %129 = vmatprep.subr.mxu0 0.0
    %130 = vmatpush1.msra.mxu0 0.0
    %131 = vmatprep.subr.mxu0 0.0
    %132 = vmatpush1.msra.mxu0 0.0
    %133 = vmatprep.subr.mxu0 0.0
    %134 = vmatpush1.msra.mxu0 0.0
    %135 = vmatprep.subr.mxu0 0.0
    %136 = vmatpush1.msra.mxu0 0.0
    %137 = vmatprep.subr.mxu0 0.0
    %138 = vmatpush1.msra.mxu0 0.0
    %139 = vmatprep.subr.mxu0 0.0
    %140 = vmatpush1.msra.mxu0 0.0
    %141 = vmatprep.subr.mxu0 0.0
    %142 = vmatpush1.msra.mxu0 0.0
    %143 = vmatprep.subr.mxu0 0.0
    %144 = vmatpush1.msra.mxu0 0.0
    %145 = vmatprep.subr.mxu0 0.0
    %146 = vmatpush1.msra.mxu0 0.0
    %147 = vmatprep.subr.mxu0 0.0
    %148 = vmatpush1.msra.mxu0 0.0
    %149 = vmatprep.subr.mxu0 0.0
    %150 = vmatpush1.msra.mxu0 0.0
    %151 = vmatprep.subr.mxu0 0.0
    %152 = vmatpush1.msra.mxu0 0.0
    %153 = vmatprep.subr.mxu0 0.0
    %154 = vmatpush1.msra.mxu0 0.0
    %155 = vmatprep.subr.mxu0 0.0
    %156 = vmatpush1.msra.mxu0 0.0
    %157 = vmatprep.subr.mxu0 0.0
    %158 = vmatpush1.msra.mxu0 0.0
    %159 = vmatprep.subr.mxu0 0.0
    %160 = vmatpush1.msra.mxu0 0.0
    %161 = vmatprep.subr.mxu0 0.0
    %162 = vmatpush1.msra.mxu0 0.0
    %163 = vmatprep.subr.mxu0 0.0
    %164 = vmatpush1.msra.mxu0 0.0
    %165 = vmatprep.subr.mxu0 0.0
    %166 = vmatpush1.msra.mxu0 0.0
    %167 = vmatprep.subr.mxu0 0.0
    %168 = vmatpush1.msra.mxu0 0.0
    %169 = vmatprep.subr.mxu0 0.0
    %170 = vmatpush1.msra.mxu0 0.0
    %171 = vmatprep.subr.mxu0 0.0
    %172 = vmatpush1.msra.mxu0 0.0
    %173 = vmatprep.subr.mxu0 0.0
    %174 = vmatpush1.msra.mxu0 0.0
    %175 = vmatprep.subr.mxu0 0.0
    %176 = vmatpush1.msra.mxu0 0.0
    %177 = vmatprep.subr.mxu0 0.0
    %178 = vmatpush1.msra.mxu0 0.0
    %179 = vmatprep.subr.mxu0 0.0
    %180 = vmatpush1.msra.mxu0 0.0
    %181 = vmatprep.subr.mxu0 0.0
    %182 = vmatpush1.msra.mxu0 0.0
    %183 = vmatprep.subr.mxu0 0.0
    %184 = vmatpush1.msra.mxu0 0.0
    %185 = vmatprep.subr.mxu0 0.0
    %186 = vmatpush1.msra.mxu0 0.0
    %187 = vmatprep.subr.mxu0 0.0
    %188 = vmatpush1.msra.mxu0 0.0
    %189 = vmatprep.mubr.f32.mxu0 0.0
    %190 = vmatmul.mubr.f32.gmra.mrb[0].mxu0 %v123
    %v191 = vpop.f32.mrb[0].mxu0
    %v192 = vadd.f32 %v119, %v191
    %v193 = vpop.f32.mrb[0].mxu0
    %194 = vdwg.mxu0
    %v195 = vmax.f32 %v192, 0.0
    %v196 = vld [vmem:[#allocation8] sm:$0xff]
    %v197 = vld [vmem:[#allocation8 + $0x8] sm:$0xff]
    %v198 = vld [vmem:[#allocation8 + $0x10] sm:$0xff]
    %v199 = vld [vmem:[#allocation8 + $0x18] sm:$0xff]
    %v200 = vld [vmem:[#allocation8 + $0x20] sm:$0xff]
    %v201 = vld [vmem:[#allocation8 + $0x28] sm:$0xff]
    %v202 = vld [vmem:[#allocation8 + $0x30] sm:$0xff]
    %v203 = vld [vmem:[#allocation8 + $0x38] sm:$0xff]
    %v204 = vld [vmem:[#allocation8 + $0x40] sm:$0xff]
    %v205 = vld [vmem:[#allocation8 + $0x48] sm:$0xff]
    %v206 = vld [vmem:[#allocation8 + $0x50] sm:$0xff]
    %v207 = vld [vmem:[#allocation8 + $0x58] sm:$0xff]
    %v208 = vld [vmem:[#allocation8 + $0x60] sm:$0xff]
    %v209 = vld [vmem:[#allocation8 + $0x68] sm:$0xff]
    %v210 = vld [vmem:[#allocation8 + $0x70] sm:$0xff]
    %v211 = vld [vmem:[#allocation8 + $0x78] sm:$0xff]
    %v212 = vld [vmem:[#allocation10] sm:$0x1]
    %v214 = vlaneseq
    %v215 = vshrl.u32 %v214, 7
    %v216 = vsub.s32 0, %v215
    %v217 = vrot.slane %v212, %v216
    %219 = vmatprep.subr.mxu0 0.0
    %220 = vmatpush1.msra.mxu0 %v196
    %221 = vmatprep.subr.mxu0 0.0
    %222 = vmatpush1.msra.mxu0 %v197
    %223 = vmatprep.subr.mxu0 0.0
    %224 = vmatpush1.msra.mxu0 %v198
    %225 = vmatprep.subr.mxu0 0.0
    %226 = vmatpush1.msra.mxu0 %v199
    %227 = vmatprep.subr.mxu0 0.0
    %228 = vmatpush1.msra.mxu0 %v200
    %229 = vmatprep.subr.mxu0 0.0
    %230 = vmatpush1.msra.mxu0 %v201
    %231 = vmatprep.subr.mxu0 0.0
    %232 = vmatpush1.msra.mxu0 %v202
    %233 = vmatprep.subr.mxu0 0.0
    %234 = vmatpush1.msra.mxu0 %v203
    %235 = vmatprep.subr.mxu0 0.0
    %236 = vmatpush1.msra.mxu0 %v204
    %237 = vmatprep.subr.mxu0 0.0
    %238 = vmatpush1.msra.mxu0 %v205
    %239 = vmatprep.subr.mxu0 0.0
    %240 = vmatpush1.msra.mxu0 %v206
    %241 = vmatprep.subr.mxu0 0.0
    %242 = vmatpush1.msra.mxu0 %v207
    %243 = vmatprep.subr.mxu0 0.0
    %244 = vmatpush1.msra.mxu0 %v208
    %245 = vmatprep.subr.mxu0 0.0
    %246 = vmatpush1.msra.mxu0 %v209
    %247 = vmatprep.subr.mxu0 0.0
    %248 = vmatpush1.msra.mxu0 %v210
    %249 = vmatprep.subr.mxu0 0.0
    %250 = vmatpush1.msra.mxu0 %v211
    %251 = vmatprep.subr.mxu0 0.0
    %252 = vmatpush1.msra.mxu0 0.0
    %253 = vmatprep.subr.mxu0 0.0
    %254 = vmatpush1.msra.mxu0 0.0
    %255 = vmatprep.subr.mxu0 0.0
    %256 = vmatpush1.msra.mxu0 0.0
    %257 = vmatprep.subr.mxu0 0.0
    %258 = vmatpush1.msra.mxu0 0.0
    %259 = vmatprep.subr.mxu0 0.0
    %260 = vmatpush1.msra.mxu0 0.0
    %261 = vmatprep.subr.mxu0 0.0
    %262 = vmatpush1.msra.mxu0 0.0
    %263 = vmatprep.subr.mxu0 0.0
    %264 = vmatpush1.msra.mxu0 0.0
    %265 = vmatprep.subr.mxu0 0.0
    %266 = vmatpush1.msra.mxu0 0.0
    %267 = vmatprep.subr.mxu0 0.0
    %268 = vmatpush1.msra.mxu0 0.0
    %269 = vmatprep.subr.mxu0 0.0
    %270 = vmatpush1.msra.mxu0 0.0
    %271 = vmatprep.subr.mxu0 0.0
    %272 = vmatpush1.msra.mxu0 0.0
    %273 = vmatprep.subr.mxu0 0.0
    %274 = vmatpush1.msra.mxu0 0.0
    %275 = vmatprep.subr.mxu0 0.0
    %276 = vmatpush1.msra.mxu0 0.0
    %277 = vmatprep.subr.mxu0 0.0
    %278 = vmatpush1.msra.mxu0 0.0
    %279 = vmatprep.subr.mxu0 0.0
    %280 = vmatpush1.msra.mxu0 0.0
    %281 = vmatprep.subr.mxu0 0.0
    %282 = vmatpush1.msra.mxu0 0.0
    %283 = vmatprep.mubr.f32.mxu0 0.0
    %284 = vmatmul.mubr.f32.gmra.mrb[0].mxu0 %v195
    %v285 = vpop.f32.mrb[0].mxu0
    %v286 = vadd.f32 %v217, %v285
    %v287 = vpop.f32.mrb[0].mxu0
    %288 = vdwg.mxu0
    %v289 = vmax.f32 %v286, 0.0
    %v290 = vld [vmem:[#allocation11] sm:$0xff]
    %v291 = vld [vmem:[#allocation11 + $0x8] sm:$0xff]
    %v292 = vld [vmem:[#allocation11 + $0x10] sm:$0xff]
    %v293 = vld [vmem:[#allocation11 + $0x18] sm:$0xff]
    %v294 = vld [vmem:[#allocation11 + $0x20] sm:$0xff]
    %v295 = vld [vmem:[#allocation11 + $0x28] sm:$0xff]
    %v296 = vld [vmem:[#allocation11 + $0x30] sm:$0xff]
    %v297 = vld [vmem:[#allocation11 + $0x38] sm:$0xff]
    %v298 = vld [vmem:[#allocation11 + $0x40] sm:$0xff]
    %v299 = vld [vmem:[#allocation11 + $0x48] sm:$0xff]
    %v300 = vld [vmem:[#allocation11 + $0x50] sm:$0xff]
    %v301 = vld [vmem:[#allocation11 + $0x58] sm:$0xff]
    %v302 = vld [vmem:[#allocation11 + $0x60] sm:$0xff]
    %v303 = vld [vmem:[#allocation11 + $0x68] sm:$0xff]
    %v304 = vld [vmem:[#allocation11 + $0x70] sm:$0xff]
    %v305 = vld [vmem:[#allocation11 + $0x78] sm:$0xff]
    %v306 = vld [vmem:[#allocation13] sm:$0x1]
    %v308 = vlaneseq
    %v309 = vshrl.u32 %v308, 7
    %v310 = vsub.s32 0, %v309
    %v311 = vrot.slane %v306, %v310
    %313 = vmatprep.subr.mxu0 0.0
    %314 = vmatpush1.msra.mxu0 %v290
    %315 = vmatprep.subr.mxu0 0.0
    %316 = vmatpush1.msra.mxu0 %v291
    %317 = vmatprep.subr.mxu0 0.0
    %318 = vmatpush1.msra.mxu0 %v292
    %319 = vmatprep.subr.mxu0 0.0
    %320 = vmatpush1.msra.mxu0 %v293
    %321 = vmatprep.subr.mxu0 0.0
    %322 = vmatpush1.msra.mxu0 %v294
    %323 = vmatprep.subr.mxu0 0.0
    %324 = vmatpush1.msra.mxu0 %v295
    %325 = vmatprep.subr.mxu0 0.0
    %326 = vmatpush1.msra.mxu0 %v296
    %327 = vmatprep.subr.mxu0 0.0
    %328 = vmatpush1.msra.mxu0 %v297
    %329 = vmatprep.subr.mxu0 0.0
    %330 = vmatpush1.msra.mxu0 %v298
    %331 = vmatprep.subr.mxu0 0.0
    %332 = vmatpush1.msra.mxu0 %v299
    %333 = vmatprep.subr.mxu0 0.0
    %334 = vmatpush1.msra.mxu0 %v300
    %335 = vmatprep.subr.mxu0 0.0
    %336 = vmatpush1.msra.mxu0 %v301
    %337 = vmatprep.subr.mxu0 0.0
    %338 = vmatpush1.msra.mxu0 %v302
    %339 = vmatprep.subr.mxu0 0.0
    %340 = vmatpush1.msra.mxu0 %v303
    %341 = vmatprep.subr.mxu0 0.0
    %342 = vmatpush1.msra.mxu0 %v304
    %343 = vmatprep.subr.mxu0 0.0
    %344 = vmatpush1.msra.mxu0 %v305
    %345 = vmatprep.subr.mxu0 0.0
    %346 = vmatpush1.msra.mxu0 0.0
    %347 = vmatprep.subr.mxu0 0.0
    %348 = vmatpush1.msra.mxu0 0.0
    %349 = vmatprep.subr.mxu0 0.0
    %350 = vmatpush1.msra.mxu0 0.0
    %351 = vmatprep.subr.mxu0 0.0
    %352 = vmatpush1.msra.mxu0 0.0
    %353 = vmatprep.subr.mxu0 0.0
    %354 = vmatpush1.msra.mxu0 0.0
    %355 = vmatprep.subr.mxu0 0.0
    %356 = vmatpush1.msra.mxu0 0.0
    %357 = vmatprep.subr.mxu0 0.0
    %358 = vmatpush1.msra.mxu0 0.0
    %359 = vmatprep.subr.mxu0 0.0
    %360 = vmatpush1.msra.mxu0 0.0
    %361 = vmatprep.subr.mxu0 0.0
    %362 = vmatpush1.msra.mxu0 0.0
    %363 = vmatprep.subr.mxu0 0.0
    %364 = vmatpush1.msra.mxu0 0.0
    %365 = vmatprep.subr.mxu0 0.0
    %366 = vmatpush1.msra.mxu0 0.0
    %367 = vmatprep.subr.mxu0 0.0
    %368 = vmatpush1.msra.mxu0 0.0
    %369 = vmatprep.subr.mxu0 0.0
    %370 = vmatpush1.msra.mxu0 0.0
    %371 = vmatprep.subr.mxu0 0.0
    %372 = vmatpush1.msra.mxu0 0.0
    %373 = vmatprep.subr.mxu0 0.0
    %374 = vmatpush1.msra.mxu0 0.0
    %375 = vmatprep.subr.mxu0 0.0
    %376 = vmatpush1.msra.mxu0 0.0
    %377 = vmatprep.mubr.f32.mxu0 0.0
    %378 = vmatmul.mubr.f32.gmra.mrb[0].mxu0 %v289
    %v379 = vpop.f32.mrb[0].mxu0
    %v380 = vadd.f32 %v311, %v379
    %v381 = vpop.f32.mrb[0].mxu0
    %382 = vdwg.mxu0
    %v383 = vtanh.pop %v380
    %384 = vst [vmem:[#allocation14] sm:$0xff] %v383
    // Predicated region
    $region58: #{wae_decoder_forward.1} parent=1 // pred_check
      _
    $region59: #{wae_decoder_forward.1} parent=1 // pred_check_branch
      %386 = sbr.rel (0) target = $region61
    $region60: #{wae_decoder_forward.1} parent=1 // pred_region
      %s388 = ssub.s32 128, 128
      %389 = vsyncadd [#allocation4], %s388
      %s391 = sshll.u32 [#allocation14], 4
      %s392 = int_to_ptr.vmem [resolvable:$true] %s391
      %394 = dma.vmem_to_hbm [thread:$0]  %s392, 128, %s7, [#allocation4]
    $region61: #{wae_decoder_forward.1} parent=1 // pred_fallthru
      _
    // Predicated region
    $region62: #{wae_decoder_forward.1} parent=1 // pred_check
      _
    $region63: #{wae_decoder_forward.1} parent=1 // pred_check_branch
      %396 = sbr.rel (0) target = $region65
    $region64: #{wae_decoder_forward.1} parent=1 // pred_region
      %397 = dma.done [#allocation4], 128
    $region65: #{wae_decoder_forward.1} parent=1 // pred_fallthru
      _
    %398 = vsyncpa [#allocation3], 1
    %399 = vsyncpa [#allocation6], 1
    %400 = vsyncpa [#allocation9], 1
    %401 = vsyncpa [#allocation12], 1
    %402 = vsyncpa [#allocation4], 1

</llo_original>
